<compile_context>
chip_gen: v5e
topology: v5e:2x2
jax: 0.10.0
libtpu: 0.0.40
codegen_flags: <defaults>
</compile_context>

<pallas_src>
import jax
import jax.numpy as jnp
from jax.experimental import pallas as pl
from jax.experimental.pallas import tpu as pltpu


def _shifted_w_taps(v):
    """dw = -1 / +1 taps of v (..., W, C): XLU roll along the sublane (W) axis,
    zeroing the wrapped border column (== the conv's zero padding in W)."""
    W = v.shape[-2]
    ax = v.ndim - 2
    col = jax.lax.broadcasted_iota(jnp.int32, v.shape, dimension=ax)
    # vm[..., w, :] = v[..., w-1, :]  (0 at w == 0)
    vm = jnp.where(col > 0, pltpu.roll(v, 1, axis=ax), 0.0)
    # vp[..., w, :] = v[..., w+1, :]  (0 at w == W-1);  roll by W-1 == roll by -1
    vp = jnp.where(col < W - 1, pltpu.roll(v, W - 1, axis=ax), 0.0)
    return vm, vp


def dwconv_kernel(x_ref, halo_ref, w_ref, b_ref, o_ref):
    # x_ref   : (Bb, Hb, W, cb)    input block (NHWC)
    # halo_ref: (Bb, 1, 2, W, cb)  row above / row below this block (zeros at image border)
    # w_ref   : (3, 3, cb)         depthwise taps for this channel block
    # b_ref   : (1, cb)            bias
    # o_ref   : (Bb, Hb, W, cb)    output block
    Bb, Hb, W, cb = x_ref.shape
    f32 = jnp.float32
    out_dt = o_ref.dtype

    # One up-front cast of the tile (for bf16 inputs: one cast pass, not nine).
    x = x_ref[...].astype(f32)
    halo = halo_ref[...].astype(f32)           # (Bb, 1, 2, W, cb)
    top = halo[:, :, 0]                        # (Bb, 1, W, cb) row above the block
    bot = halo[:, :, 1]                        # (Bb, 1, W, cb) row below the block

    w = w_ref[...].astype(f32)                 # (3, 3, cb) -- broadcasts over lanes
    b = b_ref[...].astype(f32)[0]              # (cb,)

    # dw = +/-1 taps via roll + border mask (no padded scratch, no tile copy).
    xm, xp = _shifted_w_taps(x)
    t_m, t_p = _shifted_w_taps(top)
    b_m, b_p = _shifted_w_taps(bot)

    # Row-combined taps: r_i[h] = sum_j w[i, j] * x[h, w + j - 1]
    # so that out[h] = bias + r0[h-1] + r1[h] + r2[h+1]   (dh = -1 / 0 / +1).
    r0 = xm * w[0, 0] + x * w[0, 1] + xp * w[0, 2]
    r1 = xm * w[1, 0] + x * w[1, 1] + xp * w[1, 2]
    r2 = xm * w[2, 0] + x * w[2, 1] + xp * w[2, 2]
    top_c = t_m * w[0, 0] + top * w[0, 1] + t_p * w[0, 2]   # dh=-1 tap for block row 0
    bot_c = b_m * w[2, 0] + bot * w[2, 1] + b_p * w[2, 2]   # dh=+1 tap for block row Hb-1

    if Hb == 1:
        o_ref[...] = (b + top_c + r1 + bot_c).astype(out_dt)
    else:
        if Hb > 2:
            # Interior rows: all three dh taps are row slices of this block (addressing only).
            mid = b + r0[:, 0:Hb - 2] + r1[:, 1:Hb - 1] + r2[:, 2:Hb]
            o_ref[:, 1:Hb - 1] = mid.astype(out_dt)
        # First / last rows pull their dh = -1 / +1 tap from the halo rows.
        o_ref[:, 0:1] = (b + top_c + r1[:, 0:1] + r2[:, 1:2]).astype(out_dt)
        o_ref[:, Hb - 1:Hb] = (
            b + r0[:, Hb - 2:Hb - 1] + r1[:, Hb - 1:Hb] + bot_c).astype(out_dt)


def _pick_blocks(B, H, W, C, itemsize, budget, max_row_block=None):
    """Choose (batch block, row block, channel block) and the per-step VMEM need."""
    cb = 128 if C % 128 == 0 else C            # lane-dense channel block

    def step_bytes(bb, hb):
        blk = bb * hb * W * cb
        return (2 * 2 * blk * itemsize              # x + out blocks, double-buffered
                + 2 * 2 * bb * W * cb * itemsize    # halo rows, double-buffered
                + 8 * blk * 4                       # f32 temporaries (x, xm, xp, r0..r2, sums)
                + (1 << 20))                        # weights / bias / headroom

    hb_cap = H if max_row_block is None else min(H, max_row_block)
    hb = None
    for d in range(hb_cap, 0, -1):
        if H % d == 0 and step_bytes(1, d) <= budget:
            hb = d
            break
    if hb is None:
        # TODO(synk): add W tiling for maps where even one row (W*cb) blows the budget.
        raise ValueError(
            f"dwconv_pallas: one feature-map row (W={W}, cb={cb}) does not fit the "
            f"VMEM budget of {budget} bytes; W tiling not implemented.")

    # Fold batch toward ~4 MiB of input per step (amortize ~0.35 us per-step overhead).
    target_in = 4 << 20
    bb = 1
    for d in range(B, 0, -1):
        blk_in = d * hb * W * cb * itemsize
        if B % d == 0 and step_bytes(d, hb) <= budget and \
                blk_in <= max(target_in, hb * W * cb * itemsize):
            bb = d
            break
    return bb, hb, cb, step_bytes(bb, hb)


def dwconv_pallas(x, weight, bias, H, W, *, max_row_block=None):
    """Depthwise 3x3 conv, stride 1, padding 1, groups=C (PyTorch DWConv forward).

    x      : (B, N, C) with N == H * W (token-major, n = h * W + w).
    weight : (C, 1, 3, 3) -- native PyTorch nn.Conv2d(C, C, 3, groups=C) layout.
    bias   : (C,)
    returns: (B, N, C)
    """
    B, N, C = x.shape
    assert N == H * W, (N, H, W)
    assert weight.shape == (C, 1, 3, 3), weight.shape
    assert bias.shape == (C,), bias.shape

    # PyTorch (C, 1, 3, 3) -> (3, 3, C):  w_hwc[i, j, c] == weight[c, 0, i, j].
    w_hwc = jnp.transpose(weight.reshape(C, 3, 3), (1, 2, 0))
    bias2d = bias.reshape(1, C)

    # (B, N, C) -> NHWC; matches the PyTorch permute(0,2,1).reshape(B,C,H,W) token order.
    x_nhwc = x.reshape(B, H, W, C)

    # Per-generation VMEM budget (~128 MiB v5e/v6e, 64 MiB v7x) minus headroom.
    try:
        vmem_cap = int(pltpu.get_tpu_info().vmem_capacity_bytes)
    except Exception:
        vmem_cap = 64 * 1024 * 1024            # conservative fallback
    budget = (vmem_cap * 3) // 4

    itemsize = jnp.dtype(x.dtype).itemsize
    Bb, Hb, cb, need = _pick_blocks(B, H, W, C, itemsize, budget, max_row_block)
    nB, nH, nC = B // Bb, H // Hb, C // cb

    # One-row halos above/below each row block (zeros at the image border); tiny,
    # so HBM traffic stays ~read-x-once / write-out-once.
    zrow = jnp.zeros((B, 1, W, C), x.dtype)
    if nH > 1:
        above = jnp.concatenate([zrow, x_nhwc[:, Hb - 1:H - 1:Hb]], axis=1)   # (B, nH, W, C)
        below = jnp.concatenate([x_nhwc[:, Hb::Hb], zrow], axis=1)            # (B, nH, W, C)
    else:
        above, below = zrow, zrow
    halo = jnp.stack([above, below], axis=2)                                  # (B, nH, 2, W, C)

    vmem_limit = int(min(max(need, 32 << 20), (vmem_cap * 85) // 100))

    out_nhwc = pl.pallas_call(
        dwconv_kernel,
        out_shape=jax.ShapeDtypeStruct((B, H, W, C), x.dtype),
        grid_spec=pltpu.PrefetchScalarGridSpec(
            num_scalar_prefetch=0,
            grid=(nB, nH, nC),
            in_specs=[
                pl.BlockSpec((Bb, Hb, W, cb), lambda bi, hi, ci: (bi, hi, 0, ci)),
                pl.BlockSpec((Bb, 1, 2, W, cb), lambda bi, hi, ci: (bi, hi, 0, 0, ci)),
                pl.BlockSpec((3, 3, cb), lambda bi, hi, ci: (0, 0, ci)),
                pl.BlockSpec((1, cb), lambda bi, hi, ci: (0, ci)),
            ],
            out_specs=pl.BlockSpec((Bb, Hb, W, cb), lambda bi, hi, ci: (bi, hi, 0, ci)),
        ),
        compiler_params=pltpu.CompilerParams(
            dimension_semantics=("parallel", "parallel", "parallel"),
            vmem_limit_bytes=vmem_limit),
        # TODO(synk): on v5e, if the profile still shows exposed DMA at this block
        # size, add pipeline_mode=pl.Buffered(3) on the x BlockSpec.
    )(x_nhwc, halo, w_hwc, bias2d)

    return out_nhwc.reshape(B, N, C)


def dwconv_reference(x, weight, bias, H, W):
    """Reference via lax depthwise conv (NHWC), PyTorch weight layout (C,1,3,3)."""
    B, N, C = x.shape
    x_nhwc = x.reshape(B, H, W, C)
    k = jnp.transpose(weight.reshape(C, 3, 3), (1, 2, 0)).reshape(3, 3, 1, C)  # HWIO
    out = jax.lax.conv_general_dilated(
        x_nhwc, k, window_strides=(1, 1), padding=((1, 1), (1, 1)),
        dimension_numbers=("NHWC", "HWIO", "NHWC"), feature_group_count=C)
    out = out + bias.reshape(1, 1, 1, C)
    return out.reshape(B, N, C)


if __name__ == "__main__":
    key = jax.random.PRNGKey(0)
    B, C, Hh, Ww = 2, 128, 8, 8        # C = 128 fills the 128-lane vreg exactly
    kx, kw, kb, kx2 = jax.random.split(key, 4)

    x = jax.random.normal(kx, (B, Hh * Ww, C), dtype=jnp.float32)
    weight = jax.random.normal(kw, (C, 1, 3, 3), dtype=jnp.float32) * 0.1   # PyTorch layout
    bias = jax.random.normal(kb, (C,), dtype=jnp.float32) * 0.1

    out = jax.block_until_ready(dwconv_pallas(x, weight, bias, Hh, Ww))
    ref = dwconv_reference(x, weight, bias, Hh, Ww)
    assert out.shape == (B, Hh * Ww, C)
    assert jnp.allclose(out, ref, atol=1e-5, rtol=1e-5), "mismatch vs reference conv"

    # Second config forces the row-tiling (halo) path: H = 16 split into 4-row blocks.
    H2, W2 = 16, 8
    x2 = jax.random.normal(kx2, (B, H2 * W2, C), dtype=jnp.float32)
    out2 = jax.block_until_ready(dwconv_pallas(x2, weight, bias, H2, W2, max_row_block=4))
    ref2 = dwconv_reference(x2, weight, bias, H2, W2)
    assert jnp.allclose(out2, ref2, atol=1e-5, rtol=1e-5), "mismatch vs reference (row-tiled)"

    print("KERNEL_OK")
</pallas_src>

<mosaic_0001>
module attributes {stable_mosaic.version = 11 : i64} {
  func.func @dwconv_kernel(%arg0: i32, %arg1: i32, %arg2: i32, %arg3: memref<2x8x8x128xf32, #tpu.memory_space<vmem>>, %arg4: memref<2x1x2x8x128xf32, #tpu.memory_space<vmem>>, %arg5: memref<3x3x128xf32, #tpu.memory_space<vmem>>, %arg6: memref<1x128xf32, #tpu.memory_space<vmem>>, %arg7: memref<2x8x8x128xf32, #tpu.memory_space<vmem>>) attributes {dimension_semantics = [#tpu.dimension_semantics<parallel>, #tpu.dimension_semantics<parallel>, #tpu.dimension_semantics<parallel>], iteration_bounds = array<i64: 1, 1, 1>, scalar_prefetch = 0 : i64, scratch_operands = 0 : i64, tpu.core_type = #tpu.core_type<tc>, window_params = [{transform_indices = @transform_0, window_bounds = array<i64: 2, 8, 8, 128>}, {transform_indices = @transform_1, window_bounds = array<i64: 2, 1, 2, 8, 128>}, {transform_indices = @transform_2, window_bounds = array<i64: 3, 3, 128>}, {transform_indices = @transform_3, window_bounds = array<i64: 1, 128>}, {transform_indices = @transform_4, window_bounds = array<i64: 2, 8, 8, 128>}]} {
    %c0 = arith.constant 0 : index
    %c0_0 = arith.constant 0 : index
    %c0_1 = arith.constant 0 : index
    %c0_2 = arith.constant 0 : index
    %0 = vector.load %arg3[%c0, %c0_0, %c0_1, %c0_2] : memref<2x8x8x128xf32, #tpu.memory_space<vmem>>, vector<2x8x8x128xf32>
    %c0_3 = arith.constant 0 : index
    %c0_4 = arith.constant 0 : index
    %c0_5 = arith.constant 0 : index
    %c0_6 = arith.constant 0 : index
    %c0_7 = arith.constant 0 : index
    %1 = vector.load %arg4[%c0_3, %c0_4, %c0_5, %c0_6, %c0_7] : memref<2x1x2x8x128xf32, #tpu.memory_space<vmem>>, vector<2x1x2x8x128xf32>
    %2 = vector.extract_strided_slice %1 {offsets = [0, 0, 0, 0, 0], sizes = [2, 1, 1, 8, 128], strides = [1, 1, 1, 1, 1]} : vector<2x1x2x8x128xf32> to vector<2x1x1x8x128xf32>
    %3 = vector.shape_cast %2 : vector<2x1x1x8x128xf32> to vector<2x1x8x128xf32>
    %4 = vector.extract_strided_slice %1 {offsets = [0, 0, 1, 0, 0], sizes = [2, 1, 1, 8, 128], strides = [1, 1, 1, 1, 1]} : vector<2x1x2x8x128xf32> to vector<2x1x1x8x128xf32>
    %5 = vector.shape_cast %4 : vector<2x1x1x8x128xf32> to vector<2x1x8x128xf32>
    %c0_8 = arith.constant 0 : index
    %c0_9 = arith.constant 0 : index
    %c0_10 = arith.constant 0 : index
    %6 = vector.load %arg5[%c0_8, %c0_9, %c0_10] : memref<3x3x128xf32, #tpu.memory_space<vmem>>, vector<3x3x128xf32>
    %c0_11 = arith.constant 0 : index
    %c0_12 = arith.constant 0 : index
    %7 = vector.load %arg6[%c0_11, %c0_12] : memref<1x128xf32, #tpu.memory_space<vmem>>, vector<1x128xf32>
    %8 = vector.shape_cast %7 : vector<1x128xf32> to vector<128xf32>
    %9 = tpu.iota {dimensions = array<i32: 2>} : vector<2x8x8x128xi32>
    %c0_i32 = arith.constant 0 : i32
    %10 = vector.broadcast %c0_i32 : i32 to vector<2x8x8x128xi32>
    %11 = arith.cmpi sgt, %9, %10 : vector<2x8x8x128xi32>
    %c1_i32 = arith.constant 1 : i32
    %12 = tpu.dynamic_rotate %0 by %c1_i32 dim 2 : vector<2x8x8x128xf32>, i32 -> vector<2x8x8x128xf32>
    %cst = arith.constant 0.000000e+00 : f32
    %13 = vector.broadcast %cst : f32 to vector<2x8x8x128xf32>
    %14 = arith.select %11, %12, %13 : vector<2x8x8x128xi1>, vector<2x8x8x128xf32>
    %c7_i32 = arith.constant 7 : i32
    %15 = vector.broadcast %c7_i32 : i32 to vector<2x8x8x128xi32>
    %16 = arith.cmpi slt, %9, %15 : vector<2x8x8x128xi32>
    %c7_i32_13 = arith.constant 7 : i32
    %17 = tpu.dynamic_rotate %0 by %c7_i32_13 dim 2 : vector<2x8x8x128xf32>, i32 -> vector<2x8x8x128xf32>
    %cst_14 = arith.constant 0.000000e+00 : f32
    %18 = vector.broadcast %cst_14 : f32 to vector<2x8x8x128xf32>
    %19 = arith.select %16, %17, %18 : vector<2x8x8x128xi1>, vector<2x8x8x128xf32>
    %20 = tpu.iota {dimensions = array<i32: 2>} : vector<2x1x8x128xi32>
    %c0_i32_15 = arith.constant 0 : i32
    %21 = vector.broadcast %c0_i32_15 : i32 to vector<2x1x8x128xi32>
    %22 = arith.cmpi sgt, %20, %21 : vector<2x1x8x128xi32>
    %c1_i32_16 = arith.constant 1 : i32
    %23 = tpu.dynamic_rotate %3 by %c1_i32_16 dim 2 : vector<2x1x8x128xf32>, i32 -> vector<2x1x8x128xf32>
    %cst_17 = arith.constant 0.000000e+00 : f32
    %24 = vector.broadcast %cst_17 : f32 to vector<2x1x8x128xf32>
    %25 = arith.select %22, %23, %24 : vector<2x1x8x128xi1>, vector<2x1x8x128xf32>
    %c7_i32_18 = arith.constant 7 : i32
    %26 = vector.broadcast %c7_i32_18 : i32 to vector<2x1x8x128xi32>
    %27 = arith.cmpi slt, %20, %26 : vector<2x1x8x128xi32>
    %c7_i32_19 = arith.constant 7 : i32
    %28 = tpu.dynamic_rotate %3 by %c7_i32_19 dim 2 : vector<2x1x8x128xf32>, i32 -> vector<2x1x8x128xf32>
    %cst_20 = arith.constant 0.000000e+00 : f32
    %29 = vector.broadcast %cst_20 : f32 to vector<2x1x8x128xf32>
    %30 = arith.select %27, %28, %29 : vector<2x1x8x128xi1>, vector<2x1x8x128xf32>
    %31 = tpu.iota {dimensions = array<i32: 2>} : vector<2x1x8x128xi32>
    %c0_i32_21 = arith.constant 0 : i32
    %32 = vector.broadcast %c0_i32_21 : i32 to vector<2x1x8x128xi32>
    %33 = arith.cmpi sgt, %31, %32 : vector<2x1x8x128xi32>
    %c1_i32_22 = arith.constant 1 : i32
    %34 = tpu.dynamic_rotate %5 by %c1_i32_22 dim 2 : vector<2x1x8x128xf32>, i32 -> vector<2x1x8x128xf32>
    %cst_23 = arith.constant 0.000000e+00 : f32
    %35 = vector.broadcast %cst_23 : f32 to vector<2x1x8x128xf32>
    %36 = arith.select %33, %34, %35 : vector<2x1x8x128xi1>, vector<2x1x8x128xf32>
    %c7_i32_24 = arith.constant 7 : i32
    %37 = vector.broadcast %c7_i32_24 : i32 to vector<2x1x8x128xi32>
    %38 = arith.cmpi slt, %31, %37 : vector<2x1x8x128xi32>
    %c7_i32_25 = arith.constant 7 : i32
    %39 = tpu.dynamic_rotate %5 by %c7_i32_25 dim 2 : vector<2x1x8x128xf32>, i32 -> vector<2x1x8x128xf32>
    %cst_26 = arith.constant 0.000000e+00 : f32
    %40 = vector.broadcast %cst_26 : f32 to vector<2x1x8x128xf32>
    %41 = arith.select %38, %39, %40 : vector<2x1x8x128xi1>, vector<2x1x8x128xf32>
    %42 = vector.extract_strided_slice %6 {offsets = [0, 0, 0], sizes = [1, 1, 128], strides = [1, 1, 1]} : vector<3x3x128xf32> to vector<1x1x128xf32>
    %43 = vector.shape_cast %42 : vector<1x1x128xf32> to vector<128xf32>
    %44 = vector.shape_cast %43 : vector<128xf32> to vector<1x1x1x128xf32>
    %45 = vector.broadcast %44 : vector<1x1x1x128xf32> to vector<2x8x8x128xf32>
    %46 = arith.mulf %14, %45 : vector<2x8x8x128xf32>
    %47 = vector.extract_strided_slice %6 {offsets = [0, 1, 0], sizes = [1, 1, 128], strides = [1, 1, 1]} : vector<3x3x128xf32> to vector<1x1x128xf32>
    %48 = vector.shape_cast %47 : vector<1x1x128xf32> to vector<128xf32>
    %49 = vector.shape_cast %48 : vector<128xf32> to vector<1x1x1x128xf32>
    %50 = vector.broadcast %49 : vector<1x1x1x128xf32> to vector<2x8x8x128xf32>
    %51 = arith.mulf %0, %50 : vector<2x8x8x128xf32>
    %52 = arith.addf %46, %51 : vector<2x8x8x128xf32>
    %53 = vector.extract_strided_slice %6 {offsets = [0, 2, 0], sizes = [1, 1, 128], strides = [1, 1, 1]} : vector<3x3x128xf32> to vector<1x1x128xf32>
    %54 = vector.shape_cast %53 : vector<1x1x128xf32> to vector<128xf32>
    %55 = vector.shape_cast %54 : vector<128xf32> to vector<1x1x1x128xf32>
    %56 = vector.broadcast %55 : vector<1x1x1x128xf32> to vector<2x8x8x128xf32>
    %57 = arith.mulf %19, %56 : vector<2x8x8x128xf32>
    %58 = arith.addf %52, %57 : vector<2x8x8x128xf32>
    %59 = vector.extract_strided_slice %6 {offsets = [1, 0, 0], sizes = [1, 1, 128], strides = [1, 1, 1]} : vector<3x3x128xf32> to vector<1x1x128xf32>
    %60 = vector.shape_cast %59 : vector<1x1x128xf32> to vector<128xf32>
    %61 = vector.shape_cast %60 : vector<128xf32> to vector<1x1x1x128xf32>
    %62 = vector.broadcast %61 : vector<1x1x1x128xf32> to vector<2x8x8x128xf32>
    %63 = arith.mulf %14, %62 : vector<2x8x8x128xf32>
    %64 = vector.extract_strided_slice %6 {offsets = [1, 1, 0], sizes = [1, 1, 128], strides = [1, 1, 1]} : vector<3x3x128xf32> to vector<1x1x128xf32>
    %65 = vector.shape_cast %64 : vector<1x1x128xf32> to vector<128xf32>
    %66 = vector.shape_cast %65 : vector<128xf32> to vector<1x1x1x128xf32>
    %67 = vector.broadcast %66 : vector<1x1x1x128xf32> to vector<2x8x8x128xf32>
    %68 = arith.mulf %0, %67 : vector<2x8x8x128xf32>
    %69 = arith.addf %63, %68 : vector<2x8x8x128xf32>
    %70 = vector.extract_strided_slice %6 {offsets = [1, 2, 0], sizes = [1, 1, 128], strides = [1, 1, 1]} : vector<3x3x128xf32> to vector<1x1x128xf32>
    %71 = vector.shape_cast %70 : vector<1x1x128xf32> to vector<128xf32>
    %72 = vector.shape_cast %71 : vector<128xf32> to vector<1x1x1x128xf32>
    %73 = vector.broadcast %72 : vector<1x1x1x128xf32> to vector<2x8x8x128xf32>
    %74 = arith.mulf %19, %73 : vector<2x8x8x128xf32>
    %75 = arith.addf %69, %74 : vector<2x8x8x128xf32>
    %76 = vector.extract_strided_slice %6 {offsets = [2, 0, 0], sizes = [1, 1, 128], strides = [1, 1, 1]} : vector<3x3x128xf32> to vector<1x1x128xf32>
    %77 = vector.shape_cast %76 : vector<1x1x128xf32> to vector<128xf32>
    %78 = vector.shape_cast %77 : vector<128xf32> to vector<1x1x1x128xf32>
    %79 = vector.broadcast %78 : vector<1x1x1x128xf32> to vector<2x8x8x128xf32>
    %80 = arith.mulf %14, %79 : vector<2x8x8x128xf32>
    %81 = vector.extract_strided_slice %6 {offsets = [2, 1, 0], sizes = [1, 1, 128], strides = [1, 1, 1]} : vector<3x3x128xf32> to vector<1x1x128xf32>
    %82 = vector.shape_cast %81 : vector<1x1x128xf32> to vector<128xf32>
    %83 = vector.shape_cast %82 : vector<128xf32> to vector<1x1x1x128xf32>
    %84 = vector.broadcast %83 : vector<1x1x1x128xf32> to vector<2x8x8x128xf32>
    %85 = arith.mulf %0, %84 : vector<2x8x8x128xf32>
    %86 = arith.addf %80, %85 : vector<2x8x8x128xf32>
    %87 = vector.extract_strided_slice %6 {offsets = [2, 2, 0], sizes = [1, 1, 128], strides = [1, 1, 1]} : vector<3x3x128xf32> to vector<1x1x128xf32>
    %88 = vector.shape_cast %87 : vector<1x1x128xf32> to vector<128xf32>
    %89 = vector.shape_cast %88 : vector<128xf32> to vector<1x1x1x128xf32>
    %90 = vector.broadcast %89 : vector<1x1x1x128xf32> to vector<2x8x8x128xf32>
    %91 = arith.mulf %19, %90 : vector<2x8x8x128xf32>
    %92 = arith.addf %86, %91 : vector<2x8x8x128xf32>
    %93 = vector.extract_strided_slice %6 {offsets = [0, 0, 0], sizes = [1, 1, 128], strides = [1, 1, 1]} : vector<3x3x128xf32> to vector<1x1x128xf32>
    %94 = vector.shape_cast %93 : vector<1x1x128xf32> to vector<128xf32>
    %95 = vector.shape_cast %94 : vector<128xf32> to vector<1x1x1x128xf32>
    %96 = vector.broadcast %95 : vector<1x1x1x128xf32> to vector<2x1x8x128xf32>
    %97 = arith.mulf %25, %96 : vector<2x1x8x128xf32>
    %98 = vector.extract_strided_slice %6 {offsets = [0, 1, 0], sizes = [1, 1, 128], strides = [1, 1, 1]} : vector<3x3x128xf32> to vector<1x1x128xf32>
    %99 = vector.shape_cast %98 : vector<1x1x128xf32> to vector<128xf32>
    %100 = vector.shape_cast %99 : vector<128xf32> to vector<1x1x1x128xf32>
    %101 = vector.broadcast %100 : vector<1x1x1x128xf32> to vector<2x1x8x128xf32>
    %102 = arith.mulf %3, %101 : vector<2x1x8x128xf32>
    %103 = arith.addf %97, %102 : vector<2x1x8x128xf32>
    %104 = vector.extract_strided_slice %6 {offsets = [0, 2, 0], sizes = [1, 1, 128], strides = [1, 1, 1]} : vector<3x3x128xf32> to vector<1x1x128xf32>
    %105 = vector.shape_cast %104 : vector<1x1x128xf32> to vector<128xf32>
    %106 = vector.shape_cast %105 : vector<128xf32> to vector<1x1x1x128xf32>
    %107 = vector.broadcast %106 : vector<1x1x1x128xf32> to vector<2x1x8x128xf32>
    %108 = arith.mulf %30, %107 : vector<2x1x8x128xf32>
    %109 = arith.addf %103, %108 : vector<2x1x8x128xf32>
    %110 = vector.extract_strided_slice %6 {offsets = [2, 0, 0], sizes = [1, 1, 128], strides = [1, 1, 1]} : vector<3x3x128xf32> to vector<1x1x128xf32>
    %111 = vector.shape_cast %110 : vector<1x1x128xf32> to vector<128xf32>
    %112 = vector.shape_cast %111 : vector<128xf32> to vector<1x1x1x128xf32>
    %113 = vector.broadcast %112 : vector<1x1x1x128xf32> to vector<2x1x8x128xf32>
    %114 = arith.mulf %36, %113 : vector<2x1x8x128xf32>
    %115 = vector.extract_strided_slice %6 {offsets = [2, 1, 0], sizes = [1, 1, 128], strides = [1, 1, 1]} : vector<3x3x128xf32> to vector<1x1x128xf32>
    %116 = vector.shape_cast %115 : vector<1x1x128xf32> to vector<128xf32>
    %117 = vector.shape_cast %116 : vector<128xf32> to vector<1x1x1x128xf32>
    %118 = vector.broadcast %117 : vector<1x1x1x128xf32> to vector<2x1x8x128xf32>
    %119 = arith.mulf %5, %118 : vector<2x1x8x128xf32>
    %120 = arith.addf %114, %119 : vector<2x1x8x128xf32>
    %121 = vector.extract_strided_slice %6 {offsets = [2, 2, 0], sizes = [1, 1, 128], strides = [1, 1, 1]} : vector<3x3x128xf32> to vector<1x1x128xf32>
    %122 = vector.shape_cast %121 : vector<1x1x128xf32> to vector<128xf32>
    %123 = vector.shape_cast %122 : vector<128xf32> to vector<1x1x1x128xf32>
    %124 = vector.broadcast %123 : vector<1x1x1x128xf32> to vector<2x1x8x128xf32>
    %125 = arith.mulf %41, %124 : vector<2x1x8x128xf32>
    %126 = arith.addf %120, %125 : vector<2x1x8x128xf32>
    %127 = vector.extract_strided_slice %58 {offsets = [0, 0, 0, 0], sizes = [2, 6, 8, 128], strides = [1, 1, 1, 1]} : vector<2x8x8x128xf32> to vector<2x6x8x128xf32>
    %128 = vector.shape_cast %8 : vector<128xf32> to vector<1x1x1x128xf32>
    %129 = vector.broadcast %128 : vector<1x1x1x128xf32> to vector<2x6x8x128xf32>
    %130 = arith.addf %129, %127 : vector<2x6x8x128xf32>
    %131 = vector.extract_strided_slice %75 {offsets = [0, 1, 0, 0], sizes = [2, 6, 8, 128], strides = [1, 1, 1, 1]} : vector<2x8x8x128xf32> to vector<2x6x8x128xf32>
    %132 = arith.addf %130, %131 : vector<2x6x8x128xf32>
    %133 = vector.extract_strided_slice %92 {offsets = [0, 2, 0, 0], sizes = [2, 6, 8, 128], strides = [1, 1, 1, 1]} : vector<2x8x8x128xf32> to vector<2x6x8x128xf32>
    %134 = arith.addf %132, %133 : vector<2x6x8x128xf32>
    %c0_27 = arith.constant 0 : index
    %c1 = arith.constant 1 : index
    %c0_28 = arith.constant 0 : index
    %c0_29 = arith.constant 0 : index
    %135 = vector.load %arg7[%c0_27, %c1, %c0_28, %c0_29] : memref<2x8x8x128xf32, #tpu.memory_space<vmem>>, vector<2x6x8x128xf32>
    tpu.vector_store %arg7[%c0_27, %c1, %c0_28, %c0_29], %134 {strides = array<i32>} : memref<2x8x8x128xf32, #tpu.memory_space<vmem>>, vector<2x6x8x128xf32>,
    %136 = vector.shape_cast %8 : vector<128xf32> to vector<1x1x1x128xf32>
    %137 = vector.broadcast %136 : vector<1x1x1x128xf32> to vector<2x1x8x128xf32>
    %138 = arith.addf %137, %109 : vector<2x1x8x128xf32>
    %139 = vector.extract_strided_slice %75 {offsets = [0, 0, 0, 0], sizes = [2, 1, 8, 128], strides = [1, 1, 1, 1]} : vector<2x8x8x128xf32> to vector<2x1x8x128xf32>
    %140 = arith.addf %138, %139 : vector<2x1x8x128xf32>
    %141 = vector.extract_strided_slice %92 {offsets = [0, 1, 0, 0], sizes = [2, 1, 8, 128], strides = [1, 1, 1, 1]} : vector<2x8x8x128xf32> to vector<2x1x8x128xf32>
    %142 = arith.addf %140, %141 : vector<2x1x8x128xf32>
    %c0_30 = arith.constant 0 : index
    %c0_31 = arith.constant 0 : index
    %c0_32 = arith.constant 0 : index
    %c0_33 = arith.constant 0 : index
    %143 = vector.load %arg7[%c0_30, %c0_31, %c0_32, %c0_33] : memref<2x8x8x128xf32, #tpu.memory_space<vmem>>, vector<2x1x8x128xf32>
    tpu.vector_store %arg7[%c0_30, %c0_31, %c0_32, %c0_33], %142 {strides = array<i32>} : memref<2x8x8x128xf32, #tpu.memory_space<vmem>>, vector<2x1x8x128xf32>,
    %144 = vector.extract_strided_slice %58 {offsets = [0, 6, 0, 0], sizes = [2, 1, 8, 128], strides = [1, 1, 1, 1]} : vector<2x8x8x128xf32> to vector<2x1x8x128xf32>
    %145 = vector.shape_cast %8 : vector<128xf32> to vector<1x1x1x128xf32>
    %146 = vector.broadcast %145 : vector<1x1x1x128xf32> to vector<2x1x8x128xf32>
    %147 = arith.addf %146, %144 : vector<2x1x8x128xf32>
    %148 = vector.extract_strided_slice %75 {offsets = [0, 7, 0, 0], sizes = [2, 1, 8, 128], strides = [1, 1, 1, 1]} : vector<2x8x8x128xf32> to vector<2x1x8x128xf32>
    %149 = arith.addf %147, %148 : vector<2x1x8x128xf32>
    %150 = arith.addf %149, %126 : vector<2x1x8x128xf32>
    %c0_34 = arith.constant 0 : index
    %c7 = arith.constant 7 : index
    %c0_35 = arith.constant 0 : index
    %c0_36 = arith.constant 0 : index
    %151 = vector.load %arg7[%c0_34, %c7, %c0_35, %c0_36] : memref<2x8x8x128xf32, #tpu.memory_space<vmem>>, vector<2x1x8x128xf32>
    tpu.vector_store %arg7[%c0_34, %c7, %c0_35, %c0_36], %150 {strides = array<i32>} : memref<2x8x8x128xf32, #tpu.memory_space<vmem>>, vector<2x1x8x128xf32>,
    return
  }
  func.func @transform_0(%arg0: i32, %arg1: i32, %arg2: i32) -> (i32, i32, i32, i32) {
    %c0_i32 = arith.constant 0 : i32
    %c0_i32_0 = arith.constant 0 : i32
    return %arg0, %arg1, %c0_i32, %arg2 : i32, i32, i32, i32
  }
  func.func @transform_1(%arg0: i32, %arg1: i32, %arg2: i32) -> (i32, i32, i32, i32, i32) {
    %c0_i32 = arith.constant 0 : i32
    %c0_i32_0 = arith.constant 0 : i32
    %c0_i32_1 = arith.constant 0 : i32
    return %arg0, %arg1, %c0_i32, %c0_i32_0, %arg2 : i32, i32, i32, i32, i32
  }
  func.func @transform_2(%arg0: i32, %arg1: i32, %arg2: i32) -> (i32, i32, i32) {
    %c0_i32 = arith.constant 0 : i32
    %c0_i32_0 = arith.constant 0 : i32
    %c0_i32_1 = arith.constant 0 : i32
    return %c0_i32, %c0_i32_0, %arg2 : i32, i32, i32
  }
  func.func @transform_3(%arg0: i32, %arg1: i32, %arg2: i32) -> (i32, i32) {
    %c0_i32 = arith.constant 0 : i32
    %c0_i32_0 = arith.constant 0 : i32
    return %c0_i32, %arg2 : i32, i32
  }
  func.func @transform_4(%arg0: i32, %arg1: i32, %arg2: i32) -> (i32, i32, i32, i32) {
    %c0_i32 = arith.constant 0 : i32
    %c0_i32_0 = arith.constant 0 : i32
    return %arg0, %arg1, %c0_i32, %arg2 : i32, i32, i32, i32
  }
}

</mosaic_0001>

<llo_original>
// kernel: tpu_custom_call.1
$region0: #{tpu_custom_call.1}
  #allocation0 [shape = 'u32[]', space=smem, size = 0x4, offset = 0x4, fixed_abs, tag = 'smem constant byte address 0x4 - core index']
  #allocation1 [shape = 'u32[72,128]{1,0:T(1,128)}', space=vmem, size = 0x9000, scoped, tag = 'internal scratch']
  %s0 = inlined_call_operand.hbm [shape: f32[2,8,8,128], index: 0, kind: input, shape index: {}]
  %s1 = inlined_call_operand.hbm [shape: f32[2,1,2,8,128], index: 1, kind: input, shape index: {}]
  %s2 = inlined_call_operand.hbm [shape: f32[3,3,128], index: 2, kind: input, shape index: {}]
  %s3 = inlined_call_operand.vmem [shape: f32[1,128], index: 3, kind: input, shape index: {}]
  %s4 = inlined_call_operand.hbm [shape: f32[2,8,8,128], index: 4, kind: output, shape index: {}]
  %s5 = sld [smem:[#allocation0]]
  $region38: #{tpu_custom_call.1} parent=0
    _
  %s7 = ssub.s32 1, %s5
  %s8 = scalar_select 0, %s7, %s5
  $region1: #{tpu_custom_call.1} parent=0
    #allocation2 [shape = 'u8[65536]{0}', space=vmem, size = 0x10000, scoped, tag = 'input window, operand 0, single buffered']
    #allocation3 [shape = 's32[1]{0}', space=sflag, size = 0x4, scoped, tag = 'scoped memory for tpu_custom_call.1']
    #allocation4 [shape = 's32[1]{0}', space=sflag, size = 0x4, scoped, tag = 'scoped memory for tpu_custom_call.1']
    #allocation5 [shape = 'u8[16384]{0}', space=vmem, size = 0x4000, scoped, tag = 'input window, operand 1, single buffered']
    #allocation6 [shape = 's32[1]{0}', space=sflag, size = 0x4, scoped, tag = 'scoped memory for tpu_custom_call.1']
    #allocation7 [shape = 'u8[6144]{0}', space=vmem, size = 0x1800, scoped, tag = 'input window, operand 2, single buffered']
    #allocation8 [shape = 'u8[65536]{0}', space=vmem, size = 0x10000, scoped, tag = 'output window, operand 0, single buffered']
    %9 = vsyncpa [#allocation3], 0
    %10 = vsyncpa [#allocation6], 0
    %11 = vsyncpa [#allocation4], 0
    // Predicated region
    $region2: #{tpu_custom_call.1} parent=1 // pred_check
      _
    $region3: #{tpu_custom_call.1} parent=1 // pred_check_branch
      %13 = sbr.rel (0) target = $region5
    $region4: #{tpu_custom_call.1} parent=1 // pred_region
      %15 = vsyncadd [#allocation3], 0
      %s16 = sshll.u32 %s0, 4
      %s17 = int_to_ptr.hbm [resolvable:$true] %s16
      %s18 = sshll.u32 [#allocation2], 4
      %s19 = int_to_ptr.vmem [resolvable:$true] %s18
      %24 = dma.hbm_to_vmem [thread:$0]  %s17, 2048, %s19, [#allocation3], 128, 128, 8
    $region5: #{tpu_custom_call.1} parent=1 // pred_fallthru
      _
    // Predicated region
    $region6: #{tpu_custom_call.1} parent=1 // pred_check
      _
    $region7: #{tpu_custom_call.1} parent=1 // pred_check_branch
      %26 = sbr.rel (0) target = $region9
    $region8: #{tpu_custom_call.1} parent=1 // pred_region
      %28 = vsyncadd [#allocation6], 0
      %s29 = sshll.u32 %s1, 4
      %s30 = int_to_ptr.hbm [resolvable:$true] %s29
      %s31 = sshll.u32 [#allocation5], 4
      %s32 = int_to_ptr.vmem [resolvable:$true] %s31
      %37 = dma.hbm_to_vmem [thread:$0]  %s30, 512, %s32, [#allocation6], 128, 128, 8
    $region9: #{tpu_custom_call.1} parent=1 // pred_fallthru
      _
    // Predicated region
    $region10: #{tpu_custom_call.1} parent=1 // pred_check
      _
    $region11: #{tpu_custom_call.1} parent=1 // pred_check_branch
      %39 = sbr.rel (0) target = $region13
    $region12: #{tpu_custom_call.1} parent=1 // pred_region
      %41 = vsyncadd [#allocation6], 0
      %s42 = sshll.u32 %s2, 4
      %s43 = int_to_ptr.hbm [resolvable:$true] %s42
      %s44 = sshll.u32 [#allocation7], 4
      %s45 = int_to_ptr.vmem [resolvable:$true] %s44
      %50 = dma.hbm_to_vmem [thread:$0]  %s43, 192, %s45, [#allocation6], 64, 64, 4
    $region13: #{tpu_custom_call.1} parent=1 // pred_fallthru
      _
    // Predicated region
    $region14: #{tpu_custom_call.1} parent=1 // pred_check
      _
    $region15: #{tpu_custom_call.1} parent=1 // pred_check_branch
      %52 = sbr.rel (0) target = $region17
    $region16: #{tpu_custom_call.1} parent=1 // pred_region
      _
    $region17: #{tpu_custom_call.1} parent=1 // pred_fallthru
      _
    // Predicated region
    $region18: #{tpu_custom_call.1} parent=1 // pred_check
      _
    $region19: #{tpu_custom_call.1} parent=1 // pred_check_branch
      %54 = sbr.rel (0) target = $region21
    $region20: #{tpu_custom_call.1} parent=1 // pred_region
      %56 = dma.done [#allocation3], 2048
    $region21: #{tpu_custom_call.1} parent=1 // pred_fallthru
      _
    // Predicated region
    $region22: #{tpu_custom_call.1} parent=1 // pred_check
      _
    $region23: #{tpu_custom_call.1} parent=1 // pred_check_branch
      %58 = sbr.rel (0) target = $region25
    $region24: #{tpu_custom_call.1} parent=1 // pred_region
      %60 = dma.done [#allocation6], 512
    $region25: #{tpu_custom_call.1} parent=1 // pred_fallthru
      _
    // Predicated region
    $region26: #{tpu_custom_call.1} parent=1 // pred_check
      _
    $region27: #{tpu_custom_call.1} parent=1 // pred_check_branch
      %62 = sbr.rel (0) target = $region29
    $region28: #{tpu_custom_call.1} parent=1 // pred_region
      %64 = dma.done [#allocation6], 192
    $region29: #{tpu_custom_call.1} parent=1 // pred_fallthru
      _
    %v65 = vld [vmem:[#allocation2] sm:$0xff]
    %v66 = vld [vmem:[#allocation2 + $0x8] sm:$0xff]
    %v67 = vld [vmem:[#allocation2 + $0x10] sm:$0xff]
    %v68 = vld [vmem:[#allocation2 + $0x18] sm:$0xff]
    %v69 = vld [vmem:[#allocation2 + $0x20] sm:$0xff]
    %v70 = vld [vmem:[#allocation2 + $0x28] sm:$0xff]
    %v71 = vld [vmem:[#allocation2 + $0x30] sm:$0xff]
    %v72 = vld [vmem:[#allocation2 + $0x38] sm:$0xff]
    %v73 = vld [vmem:[#allocation2 + $0x40] sm:$0xff]
    %v74 = vld [vmem:[#allocation2 + $0x48] sm:$0xff]
    %v75 = vld [vmem:[#allocation2 + $0x50] sm:$0xff]
    %v76 = vld [vmem:[#allocation2 + $0x58] sm:$0xff]
    %v77 = vld [vmem:[#allocation2 + $0x60] sm:$0xff]
    %v78 = vld [vmem:[#allocation2 + $0x68] sm:$0xff]
    %v79 = vld [vmem:[#allocation2 + $0x70] sm:$0xff]
    %v80 = vld [vmem:[#allocation2 + $0x78] sm:$0xff]
    %v81 = vld [vmem:[#allocation5] sm:$0xff]
    %v82 = vld [vmem:[#allocation5 + $0x8] sm:$0xff]
    %v83 = vld [vmem:[#allocation5 + $0x10] sm:$0xff]
    %v84 = vld [vmem:[#allocation5 + $0x18] sm:$0xff]
    %v85 = vld [vmem:[#allocation7] sm:$0x7]
    %v86 = vld [vmem:[#allocation7 + $0x4] sm:$0x7]
    %v87 = vld [vmem:[#allocation7 + $0x8] sm:$0x7]
    %v88 = vld [vmem:[%s3] sm:$0x1]
    %v89 = vlaneseq
    %v90 = vshrl.u32 %v89, 7
    %vm91 = vcmp.gt.s32.totalorder %v90, 0
    %v92 = vrot.slane %v65, 7
    %v93 = vrot.slane %v66, 7
    %v94 = vrot.slane %v67, 7
    %v95 = vrot.slane %v68, 7
    %v96 = vrot.slane %v69, 7
    %v97 = vrot.slane %v70, 7
    %v98 = vrot.slane %v71, 7
    %v99 = vrot.slane %v72, 7
    %v100 = vrot.slane %v73, 7
    %v101 = vrot.slane %v74, 7
    %v102 = vrot.slane %v75, 7
    %v103 = vrot.slane %v76, 7
    %v104 = vrot.slane %v77, 7
    %v105 = vrot.slane %v78, 7
    %v106 = vrot.slane %v79, 7
    %v107 = vrot.slane %v80, 7
    %v108 = vsel %vm91, %v92, 0.0
    %v109 = vsel %vm91, %v93, 0.0
    %v110 = vsel %vm91, %v94, 0.0
    %v111 = vsel %vm91, %v95, 0.0
    %v112 = vsel %vm91, %v96, 0.0
    %v113 = vsel %vm91, %v97, 0.0
    %v114 = vsel %vm91, %v98, 0.0
    %v115 = vsel %vm91, %v99, 0.0
    %v116 = vsel %vm91, %v100, 0.0
    %v117 = vsel %vm91, %v101, 0.0
    %v118 = vsel %vm91, %v102, 0.0
    %v119 = vsel %vm91, %v103, 0.0
    %v120 = vsel %vm91, %v104, 0.0
    %v121 = vsel %vm91, %v105, 0.0
    %v122 = vsel %vm91, %v106, 0.0
    %v123 = vsel %vm91, %v107, 0.0
    %vm124 = vcmp.lt.s32.totalorder %v90, 7
    %v125 = vrot.slane %v65, 1
    %v126 = vrot.slane %v66, 1
    %v127 = vrot.slane %v67, 1
    %v128 = vrot.slane %v68, 1
    %v129 = vrot.slane %v69, 1
    %v130 = vrot.slane %v70, 1
    %v131 = vrot.slane %v71, 1
    %v132 = vrot.slane %v72, 1
    %v133 = vrot.slane %v73, 1
    %v134 = vrot.slane %v74, 1
    %v135 = vrot.slane %v75, 1
    %v136 = vrot.slane %v76, 1
    %v137 = vrot.slane %v77, 1
    %v138 = vrot.slane %v78, 1
    %v139 = vrot.slane %v79, 1
    %v140 = vrot.slane %v80, 1
    %v141 = vsel %vm124, %v125, 0.0
    %v142 = vsel %vm124, %v126, 0.0
    %v143 = vsel %vm124, %v127, 0.0
    %v144 = vsel %vm124, %v128, 0.0
    %v145 = vsel %vm124, %v129, 0.0
    %v146 = vsel %vm124, %v130, 0.0
    %v147 = vsel %vm124, %v131, 0.0
    %v148 = vsel %vm124, %v132, 0.0
    %v149 = vsel %vm124, %v133, 0.0
    %v150 = vsel %vm124, %v134, 0.0
    %v151 = vsel %vm124, %v135, 0.0
    %v152 = vsel %vm124, %v136, 0.0
    %v153 = vsel %vm124, %v137, 0.0
    %v154 = vsel %vm124, %v138, 0.0
    %v155 = vsel %vm124, %v139, 0.0
    %v156 = vsel %vm124, %v140, 0.0
    %v157 = vrot.slane %v81, 7
    %v158 = vrot.slane %v83, 7
    %v159 = vsel %vm91, %v157, 0.0
    %v160 = vsel %vm91, %v158, 0.0
    %v161 = vrot.slane %v81, 1
    %v162 = vrot.slane %v83, 1
    %v163 = vsel %vm124, %v161, 0.0
    %v164 = vsel %vm124, %v162, 0.0
    %v165 = vrot.slane %v82, 7
    %v166 = vrot.slane %v84, 7
    %v167 = vsel %vm91, %v165, 0.0
    %v168 = vsel %vm91, %v166, 0.0
    %v169 = vrot.slane %v82, 1
    %v170 = vrot.slane %v84, 1
    %v171 = vsel %vm124, %v169, 0.0
    %v172 = vsel %vm124, %v170, 0.0
    %v173 = vperm.slane %v85, 0
    %v174 = vmul.f32 %v108, %v173
    %v175 = vmul.f32 %v109, %v173
    %v176 = vmul.f32 %v110, %v173
    %v177 = vmul.f32 %v111, %v173
    %v178 = vmul.f32 %v112, %v173
    %v179 = vmul.f32 %v113, %v173
    %v180 = vmul.f32 %v114, %v173
    %v181 = vmul.f32 %v116, %v173
    %v182 = vmul.f32 %v117, %v173
    %v183 = vmul.f32 %v118, %v173
    %v184 = vmul.f32 %v119, %v173
    %v185 = vmul.f32 %v120, %v173
    %v186 = vmul.f32 %v121, %v173
    %v187 = vmul.f32 %v122, %v173
    %v188 = vperm.slane %v85, 1
    %v189 = vmul.f32 %v65, %v188
    %v190 = vmul.f32 %v66, %v188
    %v191 = vmul.f32 %v67, %v188
    %v192 = vmul.f32 %v68, %v188
    %v193 = vmul.f32 %v69, %v188
    %v194 = vmul.f32 %v70, %v188
    %v195 = vmul.f32 %v71, %v188
    %v196 = vmul.f32 %v73, %v188
    %v197 = vmul.f32 %v74, %v188
    %v198 = vmul.f32 %v75, %v188
    %v199 = vmul.f32 %v76, %v188
    %v200 = vmul.f32 %v77, %v188
    %v201 = vmul.f32 %v78, %v188
    %v202 = vmul.f32 %v79, %v188
    %v203 = vadd.f32 %v174, %v189
    %v204 = vadd.f32 %v175, %v190
    %v205 = vadd.f32 %v176, %v191
    %v206 = vadd.f32 %v177, %v192
    %v207 = vadd.f32 %v178, %v193
    %v208 = vadd.f32 %v179, %v194
    %v209 = vadd.f32 %v180, %v195
    %v210 = vadd.f32 %v181, %v196
    %v211 = vadd.f32 %v182, %v197
    %v212 = vadd.f32 %v183, %v198
    %v213 = vadd.f32 %v184, %v199
    %v214 = vadd.f32 %v185, %v200
    %v215 = vadd.f32 %v186, %v201
    %v216 = vadd.f32 %v187, %v202
    %v217 = vperm.slane %v85, 2
    %v218 = vmul.f32 %v141, %v217
    %v219 = vmul.f32 %v142, %v217
    %v220 = vmul.f32 %v143, %v217
    %v221 = vmul.f32 %v144, %v217
    %v222 = vmul.f32 %v145, %v217
    %v223 = vmul.f32 %v146, %v217
    %v224 = vmul.f32 %v147, %v217
    %v225 = vmul.f32 %v149, %v217
    %v226 = vmul.f32 %v150, %v217
    %v227 = vmul.f32 %v151, %v217
    %v228 = vmul.f32 %v152, %v217
    %v229 = vmul.f32 %v153, %v217
    %v230 = vmul.f32 %v154, %v217
    %v231 = vmul.f32 %v155, %v217
    %v232 = vadd.f32 %v203, %v218
    %v233 = vadd.f32 %v204, %v219
    %v234 = vadd.f32 %v205, %v220
    %v235 = vadd.f32 %v206, %v221
    %v236 = vadd.f32 %v207, %v222
    %v237 = vadd.f32 %v208, %v223
    %v238 = vadd.f32 %v209, %v224
    %v239 = vadd.f32 %v210, %v225
    %v240 = vadd.f32 %v211, %v226
    %v241 = vadd.f32 %v212, %v227
    %v242 = vadd.f32 %v213, %v228
    %v243 = vadd.f32 %v214, %v229
    %v244 = vadd.f32 %v215, %v230
    %v245 = vadd.f32 %v216, %v231
    %v246 = vperm.slane %v86, 0
    %v247 = vmul.f32 %v108, %v246
    %v248 = vmul.f32 %v109, %v246
    %v249 = vmul.f32 %v110, %v246
    %v250 = vmul.f32 %v111, %v246
    %v251 = vmul.f32 %v112, %v246
    %v252 = vmul.f32 %v113, %v246
    %v253 = vmul.f32 %v114, %v246
    %v254 = vmul.f32 %v115, %v246
    %v255 = vmul.f32 %v116, %v246
    %v256 = vmul.f32 %v117, %v246
    %v257 = vmul.f32 %v118, %v246
    %v258 = vmul.f32 %v119, %v246
    %v259 = vmul.f32 %v120, %v246
    %v260 = vmul.f32 %v121, %v246
    %v261 = vmul.f32 %v122, %v246
    %v262 = vmul.f32 %v123, %v246
    %v263 = vperm.slane %v86, 1
    %v264 = vmul.f32 %v65, %v263
    %v265 = vmul.f32 %v66, %v263
    %v266 = vmul.f32 %v67, %v263
    %v267 = vmul.f32 %v68, %v263
    %v268 = vmul.f32 %v69, %v263
    %v269 = vmul.f32 %v70, %v263
    %v270 = vmul.f32 %v71, %v263
    %v271 = vmul.f32 %v72, %v263
    %v272 = vmul.f32 %v73, %v263
    %v273 = vmul.f32 %v74, %v263
    %v274 = vmul.f32 %v75, %v263
    %v275 = vmul.f32 %v76, %v263
    %v276 = vmul.f32 %v77, %v263
    %v277 = vmul.f32 %v78, %v263
    %v278 = vmul.f32 %v79, %v263
    %v279 = vmul.f32 %v80, %v263
    %v280 = vadd.f32 %v247, %v264
    %v281 = vadd.f32 %v248, %v265
    %v282 = vadd.f32 %v249, %v266
    %v283 = vadd.f32 %v250, %v267
    %v284 = vadd.f32 %v251, %v268
    %v285 = vadd.f32 %v252, %v269
    %v286 = vadd.f32 %v253, %v270
    %v287 = vadd.f32 %v254, %v271
    %v288 = vadd.f32 %v255, %v272
    %v289 = vadd.f32 %v256, %v273
    %v290 = vadd.f32 %v257, %v274
    %v291 = vadd.f32 %v258, %v275
    %v292 = vadd.f32 %v259, %v276
    %v293 = vadd.f32 %v260, %v277
    %v294 = vadd.f32 %v261, %v278
    %v295 = vadd.f32 %v262, %v279
    %v296 = vperm.slane %v86, 2
    %v297 = vmul.f32 %v141, %v296
    %v298 = vmul.f32 %v142, %v296
    %v299 = vmul.f32 %v143, %v296
    %v300 = vmul.f32 %v144, %v296
    %v301 = vmul.f32 %v145, %v296
    %v302 = vmul.f32 %v146, %v296
    %v303 = vmul.f32 %v147, %v296
    %v304 = vmul.f32 %v148, %v296
    %v305 = vmul.f32 %v149, %v296
    %v306 = vmul.f32 %v150, %v296
    %v307 = vmul.f32 %v151, %v296
    %v308 = vmul.f32 %v152, %v296
    %v309 = vmul.f32 %v153, %v296
    %v310 = vmul.f32 %v154, %v296
    %v311 = vmul.f32 %v155, %v296
    %v312 = vmul.f32 %v156, %v296
    %v313 = vadd.f32 %v280, %v297
    %v314 = vadd.f32 %v281, %v298
    %v315 = vadd.f32 %v282, %v299
    %v316 = vadd.f32 %v283, %v300
    %v317 = vadd.f32 %v284, %v301
    %v318 = vadd.f32 %v285, %v302
    %v319 = vadd.f32 %v286, %v303
    %v320 = vadd.f32 %v287, %v304
    %v321 = vadd.f32 %v288, %v305
    %v322 = vadd.f32 %v289, %v306
    %v323 = vadd.f32 %v290, %v307
    %v324 = vadd.f32 %v291, %v308
    %v325 = vadd.f32 %v292, %v309
    %v326 = vadd.f32 %v293, %v310
    %v327 = vadd.f32 %v294, %v311
    %v328 = vadd.f32 %v295, %v312
    %v329 = vperm.slane %v87, 0
    %v330 = vmul.f32 %v109, %v329
    %v331 = vmul.f32 %v110, %v329
    %v332 = vmul.f32 %v111, %v329
    %v333 = vmul.f32 %v112, %v329
    %v334 = vmul.f32 %v113, %v329
    %v335 = vmul.f32 %v114, %v329
    %v336 = vmul.f32 %v115, %v329
    %v337 = vmul.f32 %v117, %v329
    %v338 = vmul.f32 %v118, %v329
    %v339 = vmul.f32 %v119, %v329
    %v340 = vmul.f32 %v120, %v329
    %v341 = vmul.f32 %v121, %v329
    %v342 = vmul.f32 %v122, %v329
    %v343 = vmul.f32 %v123, %v329
    %v344 = vperm.slane %v87, 1
    %v345 = vmul.f32 %v66, %v344
    %v346 = vmul.f32 %v67, %v344
    %v347 = vmul.f32 %v68, %v344
    %v348 = vmul.f32 %v69, %v344
    %v349 = vmul.f32 %v70, %v344
    %v350 = vmul.f32 %v71, %v344
    %v351 = vmul.f32 %v72, %v344
    %v352 = vmul.f32 %v74, %v344
    %v353 = vmul.f32 %v75, %v344
    %v354 = vmul.f32 %v76, %v344
    %v355 = vmul.f32 %v77, %v344
    %v356 = vmul.f32 %v78, %v344
    %v357 = vmul.f32 %v79, %v344
    %v358 = vmul.f32 %v80, %v344
    %v359 = vadd.f32 %v330, %v345
    %v360 = vadd.f32 %v331, %v346
    %v361 = vadd.f32 %v332, %v347
    %v362 = vadd.f32 %v333, %v348
    %v363 = vadd.f32 %v334, %v349
    %v364 = vadd.f32 %v335, %v350
    %v365 = vadd.f32 %v336, %v351
    %v366 = vadd.f32 %v337, %v352
    %v367 = vadd.f32 %v338, %v353
    %v368 = vadd.f32 %v339, %v354
    %v369 = vadd.f32 %v340, %v355
    %v370 = vadd.f32 %v341, %v356
    %v371 = vadd.f32 %v342, %v357
    %v372 = vadd.f32 %v343, %v358
    %v373 = vperm.slane %v87, 2
    %v374 = vmul.f32 %v142, %v373
    %v375 = vmul.f32 %v143, %v373
    %v376 = vmul.f32 %v144, %v373
    %v377 = vmul.f32 %v145, %v373
    %v378 = vmul.f32 %v146, %v373
    %v379 = vmul.f32 %v147, %v373
    %v380 = vmul.f32 %v148, %v373
    %v381 = vmul.f32 %v150, %v373
    %v382 = vmul.f32 %v151, %v373
    %v383 = vmul.f32 %v152, %v373
    %v384 = vmul.f32 %v153, %v373
    %v385 = vmul.f32 %v154, %v373
    %v386 = vmul.f32 %v155, %v373
    %v387 = vmul.f32 %v156, %v373
    %v388 = vadd.f32 %v359, %v374
    %v389 = vadd.f32 %v360, %v375
    %v390 = vadd.f32 %v361, %v376
    %v391 = vadd.f32 %v362, %v377
    %v392 = vadd.f32 %v363, %v378
    %v393 = vadd.f32 %v364, %v379
    %v394 = vadd.f32 %v365, %v380
    %v395 = vadd.f32 %v366, %v381
    %v396 = vadd.f32 %v367, %v382
    %v397 = vadd.f32 %v368, %v383
    %v398 = vadd.f32 %v369, %v384
    %v399 = vadd.f32 %v370, %v385
    %v400 = vadd.f32 %v371, %v386
    %v401 = vadd.f32 %v372, %v387
    %v402 = vmul.f32 %v159, %v173
    %v403 = vmul.f32 %v160, %v173
    %v404 = vmul.f32 %v81, %v188
    %v405 = vmul.f32 %v83, %v188
    %v406 = vadd.f32 %v402, %v404
    %v407 = vadd.f32 %v403, %v405
    %v408 = vmul.f32 %v163, %v217
    %v409 = vmul.f32 %v164, %v217
    %v410 = vadd.f32 %v406, %v408
    %v411 = vadd.f32 %v407, %v409
    %v412 = vmul.f32 %v167, %v329
    %v413 = vmul.f32 %v168, %v329
    %v414 = vmul.f32 %v82, %v344
    %v415 = vmul.f32 %v84, %v344
    %v416 = vadd.f32 %v412, %v414
    %v417 = vadd.f32 %v413, %v415
    %v418 = vmul.f32 %v171, %v373
    %v419 = vmul.f32 %v172, %v373
    %v420 = vadd.f32 %v416, %v418
    %v421 = vadd.f32 %v417, %v419
    %v423 = vperm.slane %v88, 0
    %v425 = vadd.f32 %v423, %v232
    %v426 = vadd.f32 %v423, %v233
    %v427 = vadd.f32 %v423, %v234
    %v428 = vadd.f32 %v423, %v235
    %v429 = vadd.f32 %v423, %v236
    %v430 = vadd.f32 %v423, %v237
    %v431 = vadd.f32 %v423, %v239
    %v432 = vadd.f32 %v423, %v240
    %v433 = vadd.f32 %v423, %v241
    %v434 = vadd.f32 %v423, %v242
    %v435 = vadd.f32 %v423, %v243
    %v436 = vadd.f32 %v423, %v244
    %v437 = vadd.f32 %v425, %v314
    %v438 = vadd.f32 %v426, %v315
    %v439 = vadd.f32 %v427, %v316
    %v440 = vadd.f32 %v428, %v317
    %v441 = vadd.f32 %v429, %v318
    %v442 = vadd.f32 %v430, %v319
    %v443 = vadd.f32 %v431, %v322
    %v444 = vadd.f32 %v432, %v323
    %v445 = vadd.f32 %v433, %v324
    %v446 = vadd.f32 %v434, %v325
    %v447 = vadd.f32 %v435, %v326
    %v448 = vadd.f32 %v436, %v327
    %v449 = vadd.f32 %v437, %v389
    %v450 = vadd.f32 %v438, %v390
    %v451 = vadd.f32 %v439, %v391
    %v452 = vadd.f32 %v440, %v392
    %v453 = vadd.f32 %v441, %v393
    %v454 = vadd.f32 %v442, %v394
    %v455 = vadd.f32 %v443, %v396
    %v456 = vadd.f32 %v444, %v397
    %v457 = vadd.f32 %v445, %v398
    %v458 = vadd.f32 %v446, %v399
    %v459 = vadd.f32 %v447, %v400
    %v460 = vadd.f32 %v448, %v401
    %s461 = scalar_lea.vmem [#allocation8], 8
    %462 = vst [vmem:[%s461] sm:$0xff] %v449
    %463 = vst [vmem:[%s461 + $0x8] sm:$0xff] %v450
    %464 = vst [vmem:[%s461 + $0x10] sm:$0xff] %v451
    %465 = vst [vmem:[%s461 + $0x18] sm:$0xff] %v452
    %466 = vst [vmem:[%s461 + $0x20] sm:$0xff] %v453
    %467 = vst [vmem:[%s461 + $0x28] sm:$0xff] %v454
    %468 = vst [vmem:[%s461 + $0x40] sm:$0xff] %v455
    %469 = vst [vmem:[%s461 + $0x48] sm:$0xff] %v456
    %470 = vst [vmem:[%s461 + $0x50] sm:$0xff] %v457
    %471 = vst [vmem:[%s461 + $0x58] sm:$0xff] %v458
    %472 = vst [vmem:[%s461 + $0x60] sm:$0xff] %v459
    %473 = vst [vmem:[%s461 + $0x68] sm:$0xff] %v460
    %v474 = vadd.f32 %v423, %v410
    %v475 = vadd.f32 %v423, %v411
    %v476 = vadd.f32 %v474, %v313
    %v477 = vadd.f32 %v475, %v321
    %v478 = vadd.f32 %v476, %v388
    %v479 = vadd.f32 %v477, %v395
    %480 = vst [vmem:[#allocation8] sm:$0xff] %v478
    %481 = vst [vmem:[#allocation8 + $0x40] sm:$0xff] %v479
    %v482 = vadd.f32 %v423, %v238
    %v483 = vadd.f32 %v423, %v245
    %v484 = vadd.f32 %v482, %v320
    %v485 = vadd.f32 %v483, %v328
    %v486 = vadd.f32 %v484, %v420
    %v487 = vadd.f32 %v485, %v421
    %s488 = scalar_lea.vmem [#allocation8], 56
    %489 = vst [vmem:[%s488] sm:$0xff] %v486
    %490 = vst [vmem:[%s488 + $0x40] sm:$0xff] %v487
    // Predicated region
    $region30: #{tpu_custom_call.1} parent=1 // pred_check
      _
    $region31: #{tpu_custom_call.1} parent=1 // pred_check_branch
      %492 = sbr.rel (0) target = $region33
    $region32: #{tpu_custom_call.1} parent=1 // pred_region
      %494 = vsyncadd [#allocation4], 0
      %s495 = sshll.u32 [#allocation8], 4
      %s496 = int_to_ptr.vmem [resolvable:$true] %s495
      %s497 = sshll.u32 %s4, 4
      %s498 = int_to_ptr.hbm [resolvable:$true] %s497
      %503 = dma.vmem_to_hbm [thread:$0]  %s496, 2048, %s498, [#allocation4], 128, 128, 8
    $region33: #{tpu_custom_call.1} parent=1 // pred_fallthru
      _
    // Predicated region
    $region34: #{tpu_custom_call.1} parent=1 // pred_check
      _
    $region35: #{tpu_custom_call.1} parent=1 // pred_check_branch
      %505 = sbr.rel (0) target = $region37
    $region36: #{tpu_custom_call.1} parent=1 // pred_region
      %507 = dma.done [#allocation4], 2048
    $region37: #{tpu_custom_call.1} parent=1 // pred_fallthru
      _
    %508 = vsyncpa [#allocation3], 1
    %509 = vsyncpa [#allocation6], 1
    %510 = vsyncpa [#allocation4], 1

</llo_original>
